<compile_context>
chip_gen: v7x
topology: tpu7x:2x2x1
jax: 0.10.0
libtpu: 0.0.40
codegen_flags: <defaults>
</compile_context>

<pallas_src>
import math

import jax
import jax.numpy as jnp
from jax.experimental import pallas as pl
from jax.experimental.pallas import tpu as pltpu

_LANE = 128
_MAX_ROWS = 2048  # 2048 * 128 * 4B = 1 MiB per f32 input block (safe on v5e/v6e/v7x)


def _round_up(x, m):
    return ((x + m - 1) // m) * m


def dice_partial_kernel(p_ref, t_ref, inter_ref, union_ref):
    # p_ref / t_ref:        (1, R_TILE, 128) chunk of sample i (input dtype).
    # inter_ref/union_ref:  (1, 1, 128) f32 per-sample lane-partial accumulators,
    #                       resident across the K (reduction) grid axis.
    k = pl.program_id(1)

    @pl.when(k == 0)
    def _():
        inter_ref[...] = jnp.zeros_like(inter_ref)
        union_ref[...] = jnp.zeros_like(union_ref)

    p = p_ref[...].astype(jnp.float32)
    t = t_ref[...].astype(jnp.float32)

    # Keep the hot loop on the VPU (mul/add) + one sublane reduction tree each;
    # only the lane axis is collapsed later, in the wrapper.
    inter_ref[...] += jnp.sum(p * t, axis=1, keepdims=True)
    union_ref[...] += jnp.sum(p + t, axis=1, keepdims=True)


def dice_loss(predict, target):
    """Pallas DiceLoss forward. predict/target: (N, C, H, W) -> scalar f32."""
    assert predict.shape == target.shape
    N = predict.shape[0]
    D = int(math.prod(predict.shape[1:]))

    itemsize = jnp.dtype(predict.dtype).itemsize
    # Sublane packing: 8 rows for 4-byte, 16 for 2-byte, 32 for 1-byte dtypes.
    sub_mult = 8 * max(1, 4 // itemsize)

    R = pl.cdiv(D, _LANE)
    R_TILE = min(_round_up(R, sub_mult), _MAX_ROWS)
    R_pad = _round_up(R, R_TILE)
    K = R_pad // R_TILE
    D_pad = R_pad * _LANE

    p = predict.reshape(N, D)
    t = target.reshape(N, D)
    if D_pad != D:
        # Zero padding is exact: contributes 0 to both intersection and union.
        p = jnp.pad(p, ((0, 0), (0, D_pad - D)))
        t = jnp.pad(t, ((0, 0), (0, D_pad - D)))
    p = p.reshape(N, R_pad, _LANE)
    t = t.reshape(N, R_pad, _LANE)

    in_spec = pl.BlockSpec((1, R_TILE, _LANE), lambda i, k: (i, k, 0))
    out_spec = pl.BlockSpec((1, 1, _LANE), lambda i, k: (i, 0, 0))

    # Mem-bound streaming reduction: ~4 flops/elem, 2 streamed inputs.
    cost = pl.CostEstimate(
        flops=4 * N * D_pad,
        transcendentals=0,
        bytes_accessed=2 * N * D_pad * itemsize + 2 * N * _LANE * 4,
    )

    inter_out, union_out = pl.pallas_call(
        dice_partial_kernel,
        out_shape=(
            jax.ShapeDtypeStruct((N, 1, _LANE), jnp.float32),
            jax.ShapeDtypeStruct((N, 1, _LANE), jnp.float32),
        ),
        grid=(N, K),
        in_specs=[in_spec, in_spec],
        out_specs=(out_spec, out_spec),
        compiler_params=pltpu.CompilerParams(
            dimension_semantics=("parallel", "arbitrary"),
            vmem_limit_bytes=32 * 1024 * 1024,
        ),
        cost_estimate=cost,
    )(p, t)

    # Final combine over a handful of scalars: do it in plain JAX.
    smooth = jnp.float32(1.0)
    intersection = jnp.sum(inter_out, axis=(1, 2))            # (N,)
    union = jnp.sum(union_out, axis=(1, 2))                   # (N,)
    dice = (2.0 * intersection + smooth) / (union + smooth)   # (N,)
    return jnp.float32(1.0) - jnp.sum(dice) / jnp.float32(N)


def dice_loss_ref(predict, target):
    """Pure-JAX reference mirroring the PyTorch module."""
    N = target.shape[0]
    smooth = 1.0
    p = predict.reshape(N, -1).astype(jnp.float32)
    t = target.reshape(N, -1).astype(jnp.float32)
    intersection = jnp.sum(p * t, axis=1)
    union = jnp.sum(p, axis=1) + jnp.sum(t, axis=1)
    loss = (2.0 * intersection + smooth) / (union + smooth)
    return 1.0 - jnp.sum(loss) / N


if __name__ == "__main__":
    key = jax.random.PRNGKey(0)
    k1, k2 = jax.random.split(key)

    # Small shapes consistent with a UNet segmentation output: (N, C, H, W)
    N, C, H, W = 2, 4, 16, 16
    predict = jax.nn.sigmoid(jax.random.normal(k1, (N, C, H, W), jnp.float32))
    target = (jax.random.uniform(k2, (N, C, H, W), jnp.float32) > 0.5).astype(
        jnp.float32)

    loss = jax.block_until_ready(dice_loss(predict, target))
    ref = jax.block_until_ready(dice_loss_ref(predict, target))

    assert jnp.allclose(loss, ref, rtol=1e-5, atol=1e-5), (loss, ref)
    print("KERNEL_OK")
</pallas_src>

<mosaic_0001>
module attributes {stable_mosaic.version = 11 : i64} {
  func.func @dice_partial_kernel(%arg0: i32, %arg1: i32, %arg2: memref<1x8x128xf32, #tpu.memory_space<vmem>>, %arg3: memref<1x8x128xf32, #tpu.memory_space<vmem>>, %arg4: memref<1x1x128xf32, #tpu.memory_space<vmem>>, %arg5: memref<1x1x128xf32, #tpu.memory_space<vmem>>) attributes {dimension_semantics = [#tpu.dimension_semantics<parallel>, #tpu.dimension_semantics<arbitrary>], iteration_bounds = array<i64: 2, 1>, scalar_prefetch = 0 : i64, scratch_operands = 0 : i64, tpu.core_type = #tpu.core_type<tc>, window_params = [{transform_indices = @transform_0, window_bounds = array<i64: 1, 8, 128>}, {transform_indices = @transform_1, window_bounds = array<i64: 1, 8, 128>}, {transform_indices = @transform_2, window_bounds = array<i64: 1, 1, 128>}, {transform_indices = @transform_3, window_bounds = array<i64: 1, 1, 128>}]} {
    %c0_i32 = arith.constant 0 : i32
    %0 = arith.cmpi eq, %arg1, %c0_i32 : i32
    %1 = arith.extui %0 : i1 to i32
    %c0_i32_0 = arith.constant 0 : i32
    %2 = arith.cmpi ne, %1, %c0_i32_0 : i32
    scf.if %2 {
      %cst_19 = arith.constant 0.000000e+00 : f32
      %17 = vector.broadcast %cst_19 : f32 to vector<1x1x128xf32>
      %c0_20 = arith.constant 0 : index
      %c0_21 = arith.constant 0 : index
      %c0_22 = arith.constant 0 : index
      %18 = vector.load %arg4[%c0_20, %c0_21, %c0_22] : memref<1x1x128xf32, #tpu.memory_space<vmem>>, vector<1x1x128xf32>
      tpu.vector_store %arg4[%c0_20, %c0_21, %c0_22], %17 {strides = array<i32>} : memref<1x1x128xf32, #tpu.memory_space<vmem>>, vector<1x1x128xf32>,
      %cst_23 = arith.constant 0.000000e+00 : f32
      %19 = vector.broadcast %cst_23 : f32 to vector<1x1x128xf32>
      %c0_24 = arith.constant 0 : index
      %c0_25 = arith.constant 0 : index
      %c0_26 = arith.constant 0 : index
      %20 = vector.load %arg5[%c0_24, %c0_25, %c0_26] : memref<1x1x128xf32, #tpu.memory_space<vmem>>, vector<1x1x128xf32>
      tpu.vector_store %arg5[%c0_24, %c0_25, %c0_26], %19 {strides = array<i32>} : memref<1x1x128xf32, #tpu.memory_space<vmem>>, vector<1x1x128xf32>,
    } else {
    }
    %c0 = arith.constant 0 : index
    %c0_1 = arith.constant 0 : index
    %c0_2 = arith.constant 0 : index
    %3 = vector.load %arg2[%c0, %c0_1, %c0_2] : memref<1x8x128xf32, #tpu.memory_space<vmem>>, vector<1x8x128xf32>
    %c0_3 = arith.constant 0 : index
    %c0_4 = arith.constant 0 : index
    %c0_5 = arith.constant 0 : index
    %4 = vector.load %arg3[%c0_3, %c0_4, %c0_5] : memref<1x8x128xf32, #tpu.memory_space<vmem>>, vector<1x8x128xf32>
    %c0_6 = arith.constant 0 : index
    %c0_7 = arith.constant 0 : index
    %c0_8 = arith.constant 0 : index
    %5 = vector.load %arg4[%c0_6, %c0_7, %c0_8] : memref<1x1x128xf32, #tpu.memory_space<vmem>>, vector<1x1x128xf32>
    %6 = arith.mulf %3, %4 : vector<1x8x128xf32>
    %cst = arith.constant dense<0.000000e+00> : vector<1x128xf32>
    %7 = vector.multi_reduction <add>, %6, %cst [1] : vector<1x8x128xf32> to vector<1x128xf32>
    %8 = vector.shape_cast %7 : vector<1x128xf32> to vector<1x1x128xf32>
    %9 = arith.addf %5, %8 : vector<1x1x128xf32>
    %c0_9 = arith.constant 0 : index
    %c0_10 = arith.constant 0 : index
    %c0_11 = arith.constant 0 : index
    %10 = vector.load %arg4[%c0_9, %c0_10, %c0_11] : memref<1x1x128xf32, #tpu.memory_space<vmem>>, vector<1x1x128xf32>
    tpu.vector_store %arg4[%c0_9, %c0_10, %c0_11], %9 {strides = array<i32>} : memref<1x1x128xf32, #tpu.memory_space<vmem>>, vector<1x1x128xf32>,
    %c0_12 = arith.constant 0 : index
    %c0_13 = arith.constant 0 : index
    %c0_14 = arith.constant 0 : index
    %11 = vector.load %arg5[%c0_12, %c0_13, %c0_14] : memref<1x1x128xf32, #tpu.memory_space<vmem>>, vector<1x1x128xf32>
    %12 = arith.addf %3, %4 : vector<1x8x128xf32>
    %cst_15 = arith.constant dense<0.000000e+00> : vector<1x128xf32>
    %13 = vector.multi_reduction <add>, %12, %cst_15 [1] : vector<1x8x128xf32> to vector<1x128xf32>
    %14 = vector.shape_cast %13 : vector<1x128xf32> to vector<1x1x128xf32>
    %15 = arith.addf %11, %14 : vector<1x1x128xf32>
    %c0_16 = arith.constant 0 : index
    %c0_17 = arith.constant 0 : index
    %c0_18 = arith.constant 0 : index
    %16 = vector.load %arg5[%c0_16, %c0_17, %c0_18] : memref<1x1x128xf32, #tpu.memory_space<vmem>>, vector<1x1x128xf32>
    tpu.vector_store %arg5[%c0_16, %c0_17, %c0_18], %15 {strides = array<i32>} : memref<1x1x128xf32, #tpu.memory_space<vmem>>, vector<1x1x128xf32>,
    return
  }
  func.func @transform_0(%arg0: i32, %arg1: i32) -> (i32, i32, i32) {
    %c0_i32 = arith.constant 0 : i32
    %c0_i32_0 = arith.constant 0 : i32
    return %arg0, %arg1, %c0_i32 : i32, i32, i32
  }
  func.func @transform_1(%arg0: i32, %arg1: i32) -> (i32, i32, i32) {
    %c0_i32 = arith.constant 0 : i32
    %c0_i32_0 = arith.constant 0 : i32
    return %arg0, %arg1, %c0_i32 : i32, i32, i32
  }
  func.func @transform_2(%arg0: i32, %arg1: i32) -> (i32, i32, i32) {
    %c0_i32 = arith.constant 0 : i32
    %c0_i32_0 = arith.constant 0 : i32
    %c0_i32_1 = arith.constant 0 : i32
    return %arg0, %c0_i32, %c0_i32_0 : i32, i32, i32
  }
  func.func @transform_3(%arg0: i32, %arg1: i32) -> (i32, i32, i32) {
    %c0_i32 = arith.constant 0 : i32
    %c0_i32_0 = arith.constant 0 : i32
    %c0_i32_1 = arith.constant 0 : i32
    return %arg0, %c0_i32, %c0_i32_0 : i32, i32, i32
  }
}

</mosaic_0001>

<llo_original>
// kernel: tpu_custom_call.1
$region0: #{tpu_custom_call.1}
  #allocation0 [shape = 'u32[]', space=smem, size = 0x4, offset = 0x4, fixed_abs, tag = 'smem constant byte address 0x4 - core index']
  #allocation1 [shape = 'u32[144,128]{1,0:T(1,128)}', space=vmem, size = 0x12000, scoped, tag = 'internal scratch']
  %s0 = inlined_call_operand.hbm [shape: f32[2,8,128], index: 0, kind: input, shape index: {}]
  %s1 = inlined_call_operand.hbm [shape: f32[2,8,128], index: 1, kind: input, shape index: {}]
  %s2 = inlined_call_operand.hbm [shape: f32[2,1,128], index: 2, kind: output, shape index: {0}]
  %s3 = inlined_call_operand.hbm [shape: f32[2,1,128], index: 3, kind: output, shape index: {1}]
  %4 = xla_tuple %s2, %s3
  %s5 = sld [smem:[#allocation0]]
  $region61: #{tpu_custom_call.1} parent=0
    _
  %s7 = ssub.s32 1, %s5
  %s8 = scalar_select 0, %s7, %s5
  $region1: #{tpu_custom_call.1} parent=0
    #allocation2 [shape = 'u8[8192]{0}', space=vmem, size = 0x2000, scoped, tag = 'input window, operand 0']
    #allocation3 [shape = 's32[2]{0}', space=sflag, size = 0x8, scoped, tag = 'scoped memory for tpu_custom_call.1']
    #allocation4 [shape = 's32[2]{0}', space=sflag, size = 0x8, scoped, tag = 'scoped memory for tpu_custom_call.1']
    #allocation5 [shape = 'u8[8192]{0}', space=vmem, size = 0x2000, scoped, tag = 'input window, operand 1']
    #allocation6 [shape = 's32[2]{0}', space=sflag, size = 0x8, scoped, tag = 'scoped memory for tpu_custom_call.1']
    #allocation7 [shape = 'u8[1024]{0}', space=vmem, size = 0x400, scoped, tag = 'output window, operand 0']
    #allocation8 [shape = 'u8[1024]{0}', space=vmem, size = 0x400, scoped, tag = 'output window, operand 1']
    #allocation9 [shape = 's32[2]{0}', space=sflag, size = 0x8, scoped, tag = 'scoped memory for tpu_custom_call.1']
    %9 = vsyncpa [#allocation3], 0
    %s10 = scalar_lea.sflag [#allocation3], 1
    %11 = vsyncpa %s10, 0
    %12 = vsyncpa [#allocation6], 0
    %s13 = scalar_lea.sflag [#allocation6], 1
    %14 = vsyncpa %s13, 0
    %15 = vsyncpa [#allocation4], 0
    %s16 = scalar_lea.sflag [#allocation4], 1
    %17 = vsyncpa %s16, 0
    %18 = vsyncpa [#allocation9], 0
    %s19 = scalar_lea.sflag [#allocation9], 1
    %20 = vsyncpa %s19, 0
    loop: start=0, step=1, limit=4
    $region2: #{tpu_custom_call.1} parent=1 // loop_pre_header
      _
    $region3: #{tpu_custom_call.1} parent=1 // loop_header
      %s22 = sphi 0, %s26
      %p23 = scmp.ge.s32.totalorder %s22, 4
      %s29 = sphi 0, %s41
      %s30 = sphi 0, %s37
      %s31 = sphi 0, %s29
      %s32 = sphi 0, %s30
      %s33 = sphi 0, %s31
      %s34 = sphi 0, %s32
      %s46 = sphi 0, %s48
      %s49 = sphi 0, %s46
      %s50 = sphi 0, %s49
      %s66 = sphi 0, %s50
      %s74 = sphi 0, %s76
      %s77 = sphi 0, %s74
      %s78 = sphi 0, %s77
      %s94 = sphi 0, %s78
      %s100 = sphi 0, %s102
      %s103 = sphi 0, %s100
      %s104 = sphi 0, %s103
      %s120 = sphi 0, %s104
      %s126 = sphi 0, %s128
      %s129 = sphi 0, %s126
      %s130 = sphi 0, %s129
      %s146 = sphi 0, %s130
    $region4: #{tpu_custom_call.1} parent=1 // loop_header_branch
      %25 = sbr.rel (%p23) target = $region8
    $region5: #{tpu_custom_call.1} parent=1 // loop_body
      %s27 = ssub.s32 %s22, 1
      %s28 = ssub.s32 %s22, 2
      %s35 = sadd.s32 1, %s30
      %p36 = scmp.ge.s32.totalorder %s35, 1
      %s37 = scalar_select %p36, 0, %s35
      %s38 = sadd.s32 1, %s29
      %s39 = scalar_select %p36, %s38, %s29
      %p40 = scmp.ge.s32.totalorder %s39, 2
      %s41 = scalar_select %p40, 0, %s39
      %s42 = ssub.s32 %s29, %s41
      %s43 = ssub.s32 %s30, %s37
      %s44 = sor.u32 %s42, %s43
      %p45 = scmp.eq.s32.totalorder %s44, 0
      %s47 = sadd.s32 %s46, 1
      %s48 = scalar_select %p45, %s46, %s47
      %p51 = pneg %p45
      %p52 = scmp.eq.s32.totalorder %s22, 1
      %p53 = por %p51, %p52
      %p54 = scmp.ne.s32.totalorder %s46, %s49
      %p55 = scmp.eq.s32.totalorder %s22, 0
      %p56 = por %p54, %p55
      %p57 = scmp.ne.s32.totalorder %s46, %s49
      %p58 = scmp.eq.s32.totalorder %s27, 1
      %p59 = por %p57, %p58
      %p60 = scmp.ne.s32.totalorder %s49, %s50
      %p61 = scmp.eq.s32.totalorder %s27, 0
      %p62 = por %p60, %p61
      %p63 = scmp.ne.s32.totalorder %s49, %s50
      %p64 = scmp.eq.s32.totalorder %s28, 1
      %p65 = por %p63, %p64
      %p67 = scmp.ne.s32.totalorder %s50, %s66
      %p68 = scmp.eq.s32.totalorder %s28, 0
      %p69 = por %p67, %p68
      %s70 = ssub.s32 %s29, %s41
      %s71 = ssub.s32 %s30, %s37
      %s72 = sor.u32 %s70, %s71
      %p73 = scmp.eq.s32.totalorder %s72, 0
      %s75 = sadd.s32 %s74, 1
      %s76 = scalar_select %p73, %s74, %s75
      %p79 = pneg %p73
      %p80 = scmp.eq.s32.totalorder %s22, 1
      %p81 = por %p79, %p80
      %p82 = scmp.ne.s32.totalorder %s74, %s77
      %p83 = scmp.eq.s32.totalorder %s22, 0
      %p84 = por %p82, %p83
      %p85 = scmp.ne.s32.totalorder %s74, %s77
      %p86 = scmp.eq.s32.totalorder %s27, 1
      %p87 = por %p85, %p86
      %p88 = scmp.ne.s32.totalorder %s77, %s78
      %p89 = scmp.eq.s32.totalorder %s27, 0
      %p90 = por %p88, %p89
      %p91 = scmp.ne.s32.totalorder %s77, %s78
      %p92 = scmp.eq.s32.totalorder %s28, 1
      %p93 = por %p91, %p92
      %p95 = scmp.ne.s32.totalorder %s78, %s94
      %p96 = scmp.eq.s32.totalorder %s28, 0
      %p97 = por %p95, %p96
      %s98 = ssub.s32 %s29, %s41
      %p99 = scmp.eq.s32.totalorder %s98, 0
      %s101 = sadd.s32 %s100, 1
      %s102 = scalar_select %p99, %s100, %s101
      %p105 = pneg %p99
      %p106 = scmp.eq.s32.totalorder %s22, 1
      %p107 = por %p105, %p106
      %p108 = scmp.ne.s32.totalorder %s100, %s103
      %p109 = scmp.eq.s32.totalorder %s22, 0
      %p110 = por %p108, %p109
      %p111 = scmp.ne.s32.totalorder %s100, %s103
      %p112 = scmp.eq.s32.totalorder %s27, 1
      %p113 = por %p111, %p112
      %p114 = scmp.ne.s32.totalorder %s103, %s104
      %p115 = scmp.eq.s32.totalorder %s27, 0
      %p116 = por %p114, %p115
      %p117 = scmp.ne.s32.totalorder %s103, %s104
      %p118 = scmp.eq.s32.totalorder %s28, 1
      %p119 = por %p117, %p118
      %p121 = scmp.ne.s32.totalorder %s104, %s120
      %p122 = scmp.eq.s32.totalorder %s28, 0
      %p123 = por %p121, %p122
      %s124 = ssub.s32 %s29, %s41
      %p125 = scmp.eq.s32.totalorder %s124, 0
      %s127 = sadd.s32 %s126, 1
      %s128 = scalar_select %p125, %s126, %s127
      %p131 = pneg %p125
      %p132 = scmp.eq.s32.totalorder %s22, 1
      %p133 = por %p131, %p132
      %p134 = scmp.ne.s32.totalorder %s126, %s129
      %p135 = scmp.eq.s32.totalorder %s22, 0
      %p136 = por %p134, %p135
      %p137 = scmp.ne.s32.totalorder %s126, %s129
      %p138 = scmp.eq.s32.totalorder %s27, 1
      %p139 = por %p137, %p138
      %p140 = scmp.ne.s32.totalorder %s129, %s130
      %p141 = scmp.eq.s32.totalorder %s27, 0
      %p142 = por %p140, %p141
      %p143 = scmp.ne.s32.totalorder %s129, %s130
      %p144 = scmp.eq.s32.totalorder %s28, 1
      %p145 = por %p143, %p144
      %p147 = scmp.ne.s32.totalorder %s130, %s146
      %p148 = scmp.eq.s32.totalorder %s28, 0
      %p149 = por %p147, %p148
      %p150 = scmp.le.s32.totalorder 1, %s22
      %p151 = scmp.lt.s32.totalorder %s22, 3
      %p152 = pnand %p150, %p151
      %p153 = pneg %p152
      // Predicated region
      $region9: #{tpu_custom_call.1} parent=5 // pred_check
        _
      $region10: #{tpu_custom_call.1} parent=5 // pred_check_branch
        %155 = sbr.rel (%p152) target = $region12
      $region11: #{tpu_custom_call.1} parent=5 // pred_region
        %s156 = ssub.s32 %s22, 1
      $region12: #{tpu_custom_call.1} parent=5 // pred_fallthru
        _
      %p157 = scmp.lt.s32.totalorder %s22, 2
      // Predicated region
      $region13: #{tpu_custom_call.1} parent=5 // pred_check
        %p158 = pneg %p157
      $region14: #{tpu_custom_call.1} parent=5 // pred_check_branch
        %160 = sbr.rel (%p158) target = $region16
      $region15: #{tpu_custom_call.1} parent=5 // pred_region
        // Predicated region
        $region17: #{tpu_custom_call.1} parent=15 // pred_check
          %p161 = pneg %p56
        $region18: #{tpu_custom_call.1} parent=15 // pred_check_branch
          %163 = sbr.rel (%p161) target = $region20
        $region19: #{tpu_custom_call.1} parent=15 // pred_region
          %s164 = sand.u32 %s46, 1
          %s165 = scalar_lea.sflag [#allocation3], %s164
          %s166 = sand.u32 %s46, 1
          %s167 = smul.addr %s166, 8
          %s168 = scalar_lea.vmem [#allocation2], %s167
          %s170 = ssub.s32 128, 128
          %171 = vsyncadd %s165, %s170
          %s172 = sadd.s32 %s30, %s29
          %s173 = smul.addr %s172, 128
          %s174 = scalar_lea.hbm %s0, %s173
          %s176 = sshll.u32 %s168, 4
          %s177 = int_to_ptr.vmem [resolvable:$true] %s176
          %179 = dma.hbm_to_vmem [thread:$0]  %s174, 128, %s177, %s165
        $region20: #{tpu_custom_call.1} parent=15 // pred_fallthru
          _
        // Predicated region
        $region21: #{tpu_custom_call.1} parent=15 // pred_check
          %p180 = pneg %p84
        $region22: #{tpu_custom_call.1} parent=15 // pred_check_branch
          %182 = sbr.rel (%p180) target = $region24
        $region23: #{tpu_custom_call.1} parent=15 // pred_region
          %s183 = sand.u32 %s74, 1
          %s184 = scalar_lea.sflag [#allocation6], %s183
          %s185 = sand.u32 %s74, 1
          %s186 = smul.addr %s185, 8
          %s187 = scalar_lea.vmem [#allocation5], %s186
          %s189 = ssub.s32 128, 128
          %190 = vsyncadd %s184, %s189
          %s191 = sadd.s32 %s30, %s29
          %s192 = smul.addr %s191, 128
          %s193 = scalar_lea.hbm %s1, %s192
          %s195 = sshll.u32 %s187, 4
          %s196 = int_to_ptr.vmem [resolvable:$true] %s195
          %198 = dma.hbm_to_vmem [thread:$0]  %s193, 128, %s196, %s184
        $region24: #{tpu_custom_call.1} parent=15 // pred_fallthru
          _
      $region16: #{tpu_custom_call.1} parent=5 // pred_fallthru
        _
      %p199 = scmp.le.s32.totalorder 1, %s22
      %p200 = scmp.lt.s32.totalorder %s22, 3
      %p201 = pnand %p199, %p200
      %p202 = pneg %p201
      // Predicated region
      $region25: #{tpu_custom_call.1} parent=5 // pred_check
        _
      $region26: #{tpu_custom_call.1} parent=5 // pred_check_branch
        %204 = sbr.rel (%p201) target = $region28
      $region27: #{tpu_custom_call.1} parent=5 // pred_region
        %s205 = ssub.s32 %s22, 1
        %s206 = sand.u32 %s49, 1
        %s207 = scalar_lea.sflag [#allocation3], %s206
        %s208 = sand.u32 %s49, 1
        %s209 = smul.addr %s208, 8
        %s210 = scalar_lea.vmem [#allocation2], %s209
        // Predicated region
        $region29: #{tpu_custom_call.1} parent=27 // pred_check
          %p211 = pneg %p62
        $region30: #{tpu_custom_call.1} parent=27 // pred_check_branch
          %213 = sbr.rel (%p211) target = $region32
        $region31: #{tpu_custom_call.1} parent=27 // pred_region
          %214 = dma.done %s207, 128
        $region32: #{tpu_custom_call.1} parent=27 // pred_fallthru
          _
        %s215 = sand.u32 %s77, 1
        %s216 = scalar_lea.sflag [#allocation6], %s215
        %s217 = sand.u32 %s77, 1
        %s218 = smul.addr %s217, 8
        %s219 = scalar_lea.vmem [#allocation5], %s218
        // Predicated region
        $region33: #{tpu_custom_call.1} parent=27 // pred_check
          %p220 = pneg %p90
        $region34: #{tpu_custom_call.1} parent=27 // pred_check_branch
          %222 = sbr.rel (%p220) target = $region36
        $region35: #{tpu_custom_call.1} parent=27 // pred_region
          %223 = dma.done %s216, 128
        $region36: #{tpu_custom_call.1} parent=27 // pred_fallthru
          _
        %s224 = sand.u32 %s49, 1
        %s225 = scalar_lea.sflag [#allocation3], %s224
        %s226 = sand.u32 %s49, 1
        %s227 = smul.addr %s226, 8
        %s228 = scalar_lea.vmem [#allocation2], %s227
        %p229 = pneg %p62
        %p230 = pneg %p59
        %s231 = sand.u32 %s77, 1
        %s232 = scalar_lea.sflag [#allocation6], %s231
        %s233 = sand.u32 %s77, 1
        %s234 = smul.addr %s233, 8
        %s235 = scalar_lea.vmem [#allocation5], %s234
        %p236 = pneg %p90
        %p237 = pneg %p87
        %p238 = pneg %p116
        %p239 = pneg %p113
        %s240 = sand.u32 %s103, 1
        %s241 = scalar_lea.sflag [#allocation4], %s240
        %s242 = sand.u32 %s103, 1
        %s243 = scalar_lea.vmem [#allocation7], %s242
        %p244 = pneg %p142
        %p245 = pneg %p139
        %s246 = sand.u32 %s129, 1
        %s247 = scalar_lea.sflag [#allocation9], %s246
        %s248 = sand.u32 %s129, 1
        %s249 = scalar_lea.vmem [#allocation8], %s248
        %p250 = scmp.eq.s32.totalorder %s32, 0
        // Predicated region
        $region37: #{tpu_custom_call.1} parent=27 // pred_check
          %p251 = pneg %p250
        $region38: #{tpu_custom_call.1} parent=27 // pred_check_branch
          %253 = sbr.rel (%p251) target = $region40
        $region39: #{tpu_custom_call.1} parent=27 // pred_region
          %254 = vst [vmem:[%s243] sm:$0x1] 0.0
          %255 = vst [vmem:[%s249] sm:$0x1] 0.0
        $region40: #{tpu_custom_call.1} parent=27 // pred_fallthru
          _
        %v256 = vld [vmem:[%s210] sm:$0xff]
        %v257 = vld [vmem:[%s219] sm:$0xff]
        %v258 = vld [vmem:[%s243] sm:$0x1]
        %v259 = vmul.f32 %v256, %v257
        %v260 = vrot.slane %v259, 4
        %v261 = vadd.f32 %v259, %v260
        %v262 = vrot.slane %v261, 2
        %v263 = vadd.f32 %v261, %v262
        %v264 = vrot.slane %v263, 1
        %v265 = vadd.f32 %v263, %v264
        %v266 = vadd.f32 %v258, %v265
        %267 = vst [vmem:[%s243] sm:$0x1] %v266
        %v268 = vld [vmem:[%s249] sm:$0x1]
        %v269 = vadd.f32 %v256, %v257
        %v270 = vrot.slane %v269, 4
        %v271 = vadd.f32 %v269, %v270
        %v272 = vrot.slane %v271, 2
        %v273 = vadd.f32 %v271, %v272
        %v274 = vrot.slane %v273, 1
        %v275 = vadd.f32 %v273, %v274
        %v276 = vadd.f32 %v268, %v275
        %277 = vst [vmem:[%s249] sm:$0x1] %v276
        %s278 = sand.u32 %s103, 1
        %s279 = scalar_lea.sflag [#allocation4], %s278
        %s280 = sand.u32 %s103, 1
        %s281 = scalar_lea.vmem [#allocation7], %s280
        %s282 = sand.u32 %s129, 1
        %s283 = scalar_lea.sflag [#allocation9], %s282
        %s284 = sand.u32 %s129, 1
        %s285 = scalar_lea.vmem [#allocation8], %s284
        // Predicated region
        $region41: #{tpu_custom_call.1} parent=27 // pred_check
          %p286 = pneg %p113
        $region42: #{tpu_custom_call.1} parent=27 // pred_check_branch
          %288 = sbr.rel (%p286) target = $region44
        $region43: #{tpu_custom_call.1} parent=27 // pred_region
          %s290 = ssub.s32 16, 16
          %291 = vsyncadd %s279, %s290
          %s292 = smul.addr %s31, 16
          %s293 = scalar_lea.hbm %s2, %s292
          %s295 = sshll.u32 %s281, 4
          %s296 = int_to_ptr.vmem [resolvable:$true] %s295
          %298 = dma.vmem_to_hbm [thread:$0]  %s296, 16, %s293, %s279
        $region44: #{tpu_custom_call.1} parent=27 // pred_fallthru
          _
        // Predicated region
        $region45: #{tpu_custom_call.1} parent=27 // pred_check
          %p299 = pneg %p139
        $region46: #{tpu_custom_call.1} parent=27 // pred_check_branch
          %301 = sbr.rel (%p299) target = $region48
        $region47: #{tpu_custom_call.1} parent=27 // pred_region
          %s303 = ssub.s32 16, 16
          %304 = vsyncadd %s283, %s303
          %s305 = smul.addr %s31, 16
          %s306 = scalar_lea.hbm %s3, %s305
          %s308 = sshll.u32 %s285, 4
          %s309 = int_to_ptr.vmem [resolvable:$true] %s308
          %311 = dma.vmem_to_hbm [thread:$0]  %s309, 16, %s306, %s283
        $region48: #{tpu_custom_call.1} parent=27 // pred_fallthru
          _
      $region28: #{tpu_custom_call.1} parent=5 // pred_fallthru
        _
      %p312 = scmp.le.s32.totalorder 2, %s22
      // Predicated region
      $region49: #{tpu_custom_call.1} parent=5 // pred_check
        %p313 = pneg %p312
      $region50: #{tpu_custom_call.1} parent=5 // pred_check_branch
        %315 = sbr.rel (%p313) target = $region52
      $region51: #{tpu_custom_call.1} parent=5 // pred_region
        %s316 = ssub.s32 %s22, 2
        // Predicated region
        $region53: #{tpu_custom_call.1} parent=51 // pred_check
          %p317 = pneg %p119
        $region54: #{tpu_custom_call.1} parent=51 // pred_check_branch
          %319 = sbr.rel (%p317) target = $region56
        $region55: #{tpu_custom_call.1} parent=51 // pred_region
          %s320 = sand.u32 %s104, 1
          %s321 = scalar_lea.sflag [#allocation4], %s320
          %s322 = sand.u32 %s104, 1
          %s323 = scalar_lea.vmem [#allocation7], %s322
          %324 = dma.done %s321, 16
        $region56: #{tpu_custom_call.1} parent=51 // pred_fallthru
          _
        // Predicated region
        $region57: #{tpu_custom_call.1} parent=51 // pred_check
          %p325 = pneg %p145
        $region58: #{tpu_custom_call.1} parent=51 // pred_check_branch
          %327 = sbr.rel (%p325) target = $region60
        $region59: #{tpu_custom_call.1} parent=51 // pred_region
          %s328 = sand.u32 %s130, 1
          %s329 = scalar_lea.sflag [#allocation9], %s328
          %s330 = sand.u32 %s130, 1
          %s331 = scalar_lea.vmem [#allocation8], %s330
          %332 = dma.done %s329, 16
        $region60: #{tpu_custom_call.1} parent=51 // pred_fallthru
          _
      $region52: #{tpu_custom_call.1} parent=5 // pred_fallthru
        _
    $region6: #{tpu_custom_call.1} parent=1 // loop_footer
      %s26 = sadd.s32 1, %s22
    $region7: #{tpu_custom_call.1} parent=1 // loop_footer_branch
      %21 = sbr.rel target = $region3
    $region8: #{tpu_custom_call.1} parent=1 // loop_exit
      _
    %333 = vsyncpa [#allocation3], 1
    %s334 = scalar_lea.sflag [#allocation3], 1
    %335 = vsyncpa %s334, 1
    %336 = vsyncpa [#allocation6], 1
    %s337 = scalar_lea.sflag [#allocation6], 1
    %338 = vsyncpa %s337, 1
    %339 = vsyncpa [#allocation4], 1
    %s340 = scalar_lea.sflag [#allocation4], 1
    %341 = vsyncpa %s340, 1
    %342 = vsyncpa [#allocation9], 1
    %s343 = scalar_lea.sflag [#allocation9], 1
    %344 = vsyncpa %s343, 1

</llo_original>
